<compile_context>
chip_gen: v7x
topology: tpu7x:2x2x1
jax: 0.10.0
libtpu: 0.0.40
codegen_flags: <defaults>
</compile_context>

<pallas_src>
import functools

import jax
import jax.numpy as jnp
from jax.experimental import pallas as pl
from jax.experimental.pallas import tpu as pltpu

_T = 3.0
_EPS = 1e-7
_LANES = 128


def _kl_loss_kernel(pred_ref, label_ref, out_ref, acc_ref, *,
                    n_rows, tile_n, tiles_per_split):
    c = pl.program_id(0)          # split index ("parallel" -> v7x TensorCores)
    i = pl.program_id(1)          # batch tile within the split ("arbitrary")

    @pl.when(i == 0)
    def _():
        acc_ref[...] = jnp.zeros_like(acc_ref)

    # Logical (unclamped) tile index -> first global row of this tile.
    t = c * tiles_per_split + i
    row0 = t * tile_n

    # Fully out-of-range tiles (the clamped/duplicated tiles of the last split)
    # skip all transcendental and vector work.
    @pl.when(row0 < n_rows)
    def _():
        inv_t = jnp.float32(1.0 / _T)
        p = pred_ref[...].astype(jnp.float32) * inv_t
        q = label_ref[...].astype(jnp.float32) * inv_t

        # log_softmax(pred / T) along classes (lanes).
        p_max = jnp.max(p, axis=-1, keepdims=True)
        p_shift = p - p_max
        log_zp = jnp.log(jnp.sum(jnp.exp(p_shift), axis=-1, keepdims=True))
        log_predict = p_shift - log_zp

        # softmax(label / T) + 1e-7.  One reciprocal per row, broadcast multiply
        # per element.  approx=False keeps ulp-exact parity with the reference.
        q_max = jnp.max(q, axis=-1, keepdims=True)
        q_exp = jnp.exp(q - q_max)
        inv_zq = pl.reciprocal(jnp.sum(q_exp, axis=-1, keepdims=True),
                               approx=False)
        target = q_exp * inv_zq + jnp.float32(_EPS)

        # TODO(synk): for very large C (vocab-sized logits) add a class-tiling
        # grid axis with an online softmax instead of requiring the full row.
        row_contrib = jnp.sum(target * (jnp.log(target) - log_predict),
                              axis=-1, keepdims=True)          # (tile_n, 1)

        # Padded rows of the edge tile are masked only here: every reduction
        # above is lane-wise within a row, so garbage rows never mix with valid
        # rows.  Accumulate the scalar partial into a lane-dense (1, 128) acc.
        row_ids = row0 + jax.lax.broadcasted_iota(jnp.int32, row_contrib.shape, 0)
        step_sum = jnp.sum(jnp.where(row_ids < n_rows, row_contrib, 0.0))
        acc_ref[...] += step_sum

    # Deferred store: only the last step of each split writes its lane-dense
    # (1, 128) output block — partial sum in lane 0, exact zeros elsewhere.
    @pl.when(i == pl.num_programs(1) - 1)
    def _():
        lane = jax.lax.broadcasted_iota(jnp.int32, (1, _LANES), 1)
        out_ref[...] = jnp.where(lane == 0, acc_ref[...], 0.0)


def _cdiv(a, b):
    return -(-a // b)


def _vmem_config():
    """(vmem_limit_bytes, input VMEM budget) gated on the chip generation."""
    try:
        vmem = int(getattr(pltpu.get_tpu_info(), "vmem_capacity_bytes", 0) or 0)
    except Exception:
        vmem = 0
    if vmem >= 128 * 1024 * 1024:          # v5e / v6e: 128 MiB physical VMEM
        return 64 * 1024 * 1024, 32 * 1024 * 1024
    # Unknown chip or v7x (64 MiB per TensorCore): stay conservative.
    return 32 * 1024 * 1024, 16 * 1024 * 1024


def _num_splits_for_device():
    """2 only when one Pallas call spans two TensorCores (v7x); else 1."""
    try:
        dev = jax.devices()[0]
        if dev.platform != "tpu":
            return 1
        return 2 if int(getattr(dev, "num_cores", 1) or 1) >= 2 else 1
    except Exception:
        return 1


def _choose_tile_n(n_rows, n_classes, *, input_vmem_budget, max_tile=2048):
    """Largest batch tile s.t. 2 inputs x 2 pipeline bufs x tile x C_pad x 4B fits."""
    c_pad = _cdiv(max(n_classes, 1), _LANES) * _LANES
    tile = input_vmem_budget // (2 * 2 * c_pad * 4)
    tile = max(8, min(int(tile), max_tile))
    tile = (tile // 8) * 8
    if tile >= n_rows:
        return n_rows          # a single full-array block is always legal
    return tile


def kl_loss(pred, label, en=True, *, tile_n=None, num_splits=None):
    """Pallas equivalent of KLLoss.forward(pred, label, en)."""
    assert pred.ndim == 2 and pred.shape == label.shape
    n_rows, n_classes = pred.shape

    vmem_limit_bytes, input_budget = _vmem_config()
    if tile_n is None:
        tile_n = _choose_tile_n(n_rows, n_classes, input_vmem_budget=input_budget)
    assert tile_n == n_rows or tile_n % 8 == 0, "tile_n must be 8-aligned or full"

    tiles_total = _cdiv(n_rows, tile_n)
    if num_splits is None:
        num_splits = _num_splits_for_device()
    if tiles_total < 2:
        num_splits = 1          # never launch a core's worth of fully-masked grid
    tiles_per_split = _cdiv(tiles_total, num_splits)
    grid = (num_splits, tiles_per_split)

    def in_map(c, i):
        # Clamp fully out-of-range tiles of the last split onto the last real
        # tile; their compute is skipped by the pl.when guard in the kernel.
        t = c * tiles_per_split + i
        return (jnp.minimum(t, tiles_total - 1), 0)

    kernel = functools.partial(
        _kl_loss_kernel,
        n_rows=n_rows, tile_n=tile_n, tiles_per_split=tiles_per_split)

    partials = pl.pallas_call(
        kernel,
        out_shape=jax.ShapeDtypeStruct((1, num_splits * _LANES), jnp.float32),
        grid_spec=pltpu.PrefetchScalarGridSpec(
            num_scalar_prefetch=0,
            grid=grid,
            in_specs=[
                pl.BlockSpec((tile_n, n_classes), in_map),
                pl.BlockSpec((tile_n, n_classes), in_map),
            ],
            out_specs=pl.BlockSpec((1, _LANES), lambda c, i: (0, c)),
            scratch_shapes=[pltpu.VMEM((1, _LANES), jnp.float32)],
        ),
        compiler_params=pltpu.CompilerParams(
            dimension_semantics=("parallel", "arbitrary"),
            vmem_limit_bytes=vmem_limit_bytes,
        ),
    )(pred, label)

    # Non-partial lanes are written as exact zeros, so a plain sum combines the
    # per-split partials (also fine when num_splits == 1).
    loss = jnp.sum(partials) / n_rows
    if en:
        loss = (_T * _T) * loss
    return loss


def _kl_loss_ref(pred, label, en=True):
    """Pure-JAX reference mirroring the PyTorch forward."""
    T = _T
    log_predict = jax.nn.log_softmax(pred / T, axis=1)
    target = jax.nn.softmax(label / T, axis=1) + _EPS
    s = jnp.sum(target * (jnp.log(target) - log_predict), axis=1).sum() / pred.shape[0]
    return T * T * s if en else s


if __name__ == "__main__":
    key = jax.random.PRNGKey(0)
    k1, k2, k3, k4, k5, k6 = jax.random.split(key, 6)

    # Case 1: divisible batch, default tiling, en=True / en=False.
    N, C = 16, 32
    pred = jax.random.normal(k1, (N, C), dtype=jnp.float32)
    label = jax.random.normal(k2, (N, C), dtype=jnp.float32)
    out = jax.block_until_ready(kl_loss(pred, label, en=True))
    ref = _kl_loss_ref(pred, label, en=True)
    assert jnp.allclose(out, ref, rtol=1e-5, atol=1e-5), (out, ref)

    out_noen = jax.block_until_ready(kl_loss(pred, label, en=False))
    ref_noen = _kl_loss_ref(pred, label, en=False)
    assert jnp.allclose(out_noen, ref_noen, rtol=1e-5, atol=1e-5), (out_noen, ref_noen)

    # Case 2: batch not divisible by 8 (single full-array block).
    N2, C2 = 13, 32
    pred2 = jax.random.normal(k3, (N2, C2), dtype=jnp.float32)
    label2 = jax.random.normal(k4, (N2, C2), dtype=jnp.float32)
    out2 = jax.block_until_ready(kl_loss(pred2, label2, en=True))
    ref2 = _kl_loss_ref(pred2, label2, en=True)
    assert jnp.allclose(out2, ref2, rtol=1e-5, atol=1e-5), (out2, ref2)

    # Case 3: N not a multiple of the tile, multiple tiles -> exercises the
    # edge-tile row mask, the clamped duplicated tile, and the pl.when compute
    # guard, for both the 1-split and the 2-split ("parallel") grid.
    N3, C3 = 21, 32
    pred3 = jax.random.normal(k5, (N3, C3), dtype=jnp.float32)
    label3 = jax.random.normal(k6, (N3, C3), dtype=jnp.float32)
    ref3 = _kl_loss_ref(pred3, label3, en=True)
    for ns in (1, 2):
        out3 = jax.block_until_ready(
            kl_loss(pred3, label3, en=True, tile_n=8, num_splits=ns))
        assert jnp.allclose(out3, ref3, rtol=1e-5, atol=1e-5), (ns, out3, ref3)

    print("KERNEL_OK")
</pallas_src>

<mosaic_0001>
module attributes {stable_mosaic.version = 11 : i64} {
  func.func @_kl_loss_kernel(%arg0: i32, %arg1: i32, %arg2: memref<16x32xf32, #tpu.memory_space<vmem>>, %arg3: memref<16x32xf32, #tpu.memory_space<vmem>>, %arg4: memref<1x128xf32, #tpu.memory_space<vmem>>, %arg5: memref<1x128xf32, #tpu.memory_space<vmem>>) attributes {dimension_semantics = [#tpu.dimension_semantics<parallel>, #tpu.dimension_semantics<arbitrary>], iteration_bounds = array<i64: 1, 1>, scalar_prefetch = 0 : i64, scratch_operands = 1 : i64, tpu.core_type = #tpu.core_type<tc>, window_params = [{transform_indices = @transform_0, window_bounds = array<i64: 16, 32>}, {transform_indices = @transform_1, window_bounds = array<i64: 16, 32>}, {transform_indices = @transform_2, window_bounds = array<i64: 1, 128>}]} {
    %c0_i32 = arith.constant 0 : i32
    %0 = arith.cmpi eq, %arg1, %c0_i32 : i32
    %1 = arith.extui %0 : i1 to i32
    %c0_i32_0 = arith.constant 0 : i32
    %2 = arith.cmpi ne, %1, %c0_i32_0 : i32
    scf.if %2 {
      %cst = arith.constant 0.000000e+00 : f32
      %12 = vector.broadcast %cst : f32 to vector<1x128xf32>
      %c0 = arith.constant 0 : index
      %c0_5 = arith.constant 0 : index
      %13 = vector.load %arg5[%c0, %c0_5] : memref<1x128xf32, #tpu.memory_space<vmem>>, vector<1x128xf32>
      tpu.vector_store %arg5[%c0, %c0_5], %12 {strides = array<i32>} : memref<1x128xf32, #tpu.memory_space<vmem>>, vector<1x128xf32>,
    } else {
    }
    %c1_i32 = arith.constant 1 : i32
    %3 = arith.muli %arg0, %c1_i32 : i32
    %4 = arith.addi %3, %arg1 : i32
    %c16_i32 = arith.constant 16 : i32
    %5 = arith.muli %4, %c16_i32 : i32
    %c16_i32_1 = arith.constant 16 : i32
    %6 = arith.cmpi slt, %5, %c16_i32_1 : i32
    %7 = arith.extui %6 : i1 to i32
    %c0_i32_2 = arith.constant 0 : i32
    %8 = arith.cmpi ne, %7, %c0_i32_2 : i32
    scf.if %8 {
      %c0 = arith.constant 0 : index
      %c0_5 = arith.constant 0 : index
      %12 = vector.load %arg2[%c0, %c0_5] : memref<16x32xf32, #tpu.memory_space<vmem>>, vector<16x32xf32>
      %cst = arith.constant 0.333333343 : f32
      %13 = vector.broadcast %cst : f32 to vector<16x32xf32>
      %14 = arith.mulf %12, %13 : vector<16x32xf32>
      %c0_6 = arith.constant 0 : index
      %c0_7 = arith.constant 0 : index
      %15 = vector.load %arg3[%c0_6, %c0_7] : memref<16x32xf32, #tpu.memory_space<vmem>>, vector<16x32xf32>
      %cst_8 = arith.constant 0.333333343 : f32
      %16 = vector.broadcast %cst_8 : f32 to vector<16x32xf32>
      %17 = arith.mulf %15, %16 : vector<16x32xf32>
      %cst_9 = arith.constant dense<0xFF800000> : vector<16xf32>
      %18 = vector.multi_reduction <maximumf>, %14, %cst_9 [1] : vector<16x32xf32> to vector<16xf32>
      %19 = vector.shape_cast %18 : vector<16xf32> to vector<16x1xf32>
      %20 = vector.broadcast %19 : vector<16x1xf32> to vector<16x32xf32>
      %21 = arith.subf %14, %20 : vector<16x32xf32>
      %22 = math.exp %21 : vector<16x32xf32>
      %cst_10 = arith.constant dense<0.000000e+00> : vector<16xf32>
      %23 = vector.multi_reduction <add>, %22, %cst_10 [1] : vector<16x32xf32> to vector<16xf32>
      %24 = vector.shape_cast %23 : vector<16xf32> to vector<16x1xf32>
      %25 = math.log %24 : vector<16x1xf32>
      %26 = vector.broadcast %25 : vector<16x1xf32> to vector<16x32xf32>
      %27 = arith.subf %21, %26 : vector<16x32xf32>
      %cst_11 = arith.constant dense<0xFF800000> : vector<16xf32>
      %28 = vector.multi_reduction <maximumf>, %17, %cst_11 [1] : vector<16x32xf32> to vector<16xf32>
      %29 = vector.shape_cast %28 : vector<16xf32> to vector<16x1xf32>
      %30 = vector.broadcast %29 : vector<16x1xf32> to vector<16x32xf32>
      %31 = arith.subf %17, %30 : vector<16x32xf32>
      %32 = math.exp %31 : vector<16x32xf32>
      %cst_12 = arith.constant dense<0.000000e+00> : vector<16xf32>
      %33 = vector.multi_reduction <add>, %32, %cst_12 [1] : vector<16x32xf32> to vector<16xf32>
      %34 = vector.shape_cast %33 : vector<16xf32> to vector<16x1xf32>
      %35 = tpu.reciprocal %34 : vector<16x1xf32> -> vector<16x1xf32>
      %36 = vector.broadcast %35 : vector<16x1xf32> to vector<16x32xf32>
      %37 = arith.mulf %32, %36 : vector<16x32xf32>
      %cst_13 = arith.constant 1.000000e-07 : f32
      %38 = vector.broadcast %cst_13 : f32 to vector<16x32xf32>
      %39 = arith.addf %37, %38 : vector<16x32xf32>
      %40 = math.log %39 : vector<16x32xf32>
      %41 = arith.subf %40, %27 : vector<16x32xf32>
      %42 = arith.mulf %39, %41 : vector<16x32xf32>
      %cst_14 = arith.constant dense<0.000000e+00> : vector<16xf32>
      %43 = vector.multi_reduction <add>, %42, %cst_14 [1] : vector<16x32xf32> to vector<16xf32>
      %44 = vector.shape_cast %43 : vector<16xf32> to vector<16x1xf32>
      %45 = tpu.iota {dimensions = array<i32: 0>} : vector<16x1xi32>
      %46 = vector.broadcast %5 : i32 to vector<16x1xi32>
      %47 = arith.addi %46, %45 : vector<16x1xi32>
      %c16_i32_15 = arith.constant 16 : i32
      %48 = vector.broadcast %c16_i32_15 : i32 to vector<16x1xi32>
      %49 = arith.cmpi slt, %47, %48 : vector<16x1xi32>
      %cst_16 = arith.constant 0.000000e+00 : f32
      %50 = vector.broadcast %cst_16 : f32 to vector<16x1xf32>
      %51 = arith.select %49, %44, %50 : vector<16x1xi1>, vector<16x1xf32>
      %52 = vector.shape_cast %51 : vector<16x1xf32> to vector<1x16x1xf32>
      %cst_17 = arith.constant dense<0.000000e+00> : vector<1xf32>
      %53 = vector.multi_reduction <add>, %52, %cst_17 [1, 2] : vector<1x16x1xf32> to vector<1xf32>
      %54 = vector.shape_cast %53 : vector<1xf32> to vector<1x1x1xf32>
      %55 = vector.extract %54[0, 0, 0] : f32 from vector<1x1x1xf32>
      %c0_18 = arith.constant 0 : index
      %c0_19 = arith.constant 0 : index
      %56 = vector.load %arg5[%c0_18, %c0_19] : memref<1x128xf32, #tpu.memory_space<vmem>>, vector<1x128xf32>
      %57 = vector.broadcast %55 : f32 to vector<1x128xf32>
      %58 = arith.addf %56, %57 : vector<1x128xf32>
      %c0_20 = arith.constant 0 : index
      %c0_21 = arith.constant 0 : index
      %59 = vector.load %arg5[%c0_20, %c0_21] : memref<1x128xf32, #tpu.memory_space<vmem>>, vector<1x128xf32>
      tpu.vector_store %arg5[%c0_20, %c0_21], %58 {strides = array<i32>} : memref<1x128xf32, #tpu.memory_space<vmem>>, vector<1x128xf32>,
    } else {
    }
    %c0_i32_3 = arith.constant 0 : i32
    %9 = arith.cmpi eq, %arg1, %c0_i32_3 : i32
    %10 = arith.extui %9 : i1 to i32
    %c0_i32_4 = arith.constant 0 : i32
    %11 = arith.cmpi ne, %10, %c0_i32_4 : i32
    scf.if %11 {
      %12 = tpu.iota {dimensions = array<i32: 1>} : vector<1x128xi32>
      %c0_i32_5 = arith.constant 0 : i32
      %13 = vector.broadcast %c0_i32_5 : i32 to vector<1x128xi32>
      %14 = arith.cmpi eq, %12, %13 : vector<1x128xi32>
      %c0 = arith.constant 0 : index
      %c0_6 = arith.constant 0 : index
      %15 = vector.load %arg5[%c0, %c0_6] : memref<1x128xf32, #tpu.memory_space<vmem>>, vector<1x128xf32>
      %cst = arith.constant 0.000000e+00 : f32
      %16 = vector.broadcast %cst : f32 to vector<1x128xf32>
      %17 = arith.select %14, %15, %16 : vector<1x128xi1>, vector<1x128xf32>
      %c0_7 = arith.constant 0 : index
      %c0_8 = arith.constant 0 : index
      %18 = vector.load %arg4[%c0_7, %c0_8] : memref<1x128xf32, #tpu.memory_space<vmem>>, vector<1x128xf32>
      tpu.vector_store %arg4[%c0_7, %c0_8], %17 {strides = array<i32>} : memref<1x128xf32, #tpu.memory_space<vmem>>, vector<1x128xf32>,
    } else {
    }
    return
  }
  func.func @transform_0(%arg0: i32, %arg1: i32) -> (i32, i32) {
    %c1_i32 = arith.constant 1 : i32
    %0 = arith.muli %arg0, %c1_i32 : i32
    %1 = arith.addi %0, %arg1 : i32
    %c0_i32 = arith.constant 0 : i32
    %2 = arith.minsi %1, %c0_i32 : i32
    %c0_i32_0 = arith.constant 0 : i32
    %c0_i32_1 = arith.constant 0 : i32
    return %2, %c0_i32_0 : i32, i32
  }
  func.func @transform_1(%arg0: i32, %arg1: i32) -> (i32, i32) {
    %c1_i32 = arith.constant 1 : i32
    %0 = arith.muli %arg0, %c1_i32 : i32
    %1 = arith.addi %0, %arg1 : i32
    %c0_i32 = arith.constant 0 : i32
    %2 = arith.minsi %1, %c0_i32 : i32
    %c0_i32_0 = arith.constant 0 : i32
    %c0_i32_1 = arith.constant 0 : i32
    return %2, %c0_i32_0 : i32, i32
  }
  func.func @transform_2(%arg0: i32, %arg1: i32) -> (i32, i32) {
    %c0_i32 = arith.constant 0 : i32
    %c0_i32_0 = arith.constant 0 : i32
    return %c0_i32, %arg0 : i32, i32
  }
}

</mosaic_0001>

<llo_original>
// kernel: tpu_custom_call.1
$region0: #{tpu_custom_call.1}
  #allocation0 [shape = 'u32[]', space=smem, size = 0x4, offset = 0x4, fixed_abs, tag = 'smem constant byte address 0x4 - core index']
  #allocation1 [shape = 'u32[144,128]{1,0:T(1,128)}', space=vmem, size = 0x12000, scoped, tag = 'internal scratch']
  #allocation2 [shape = 'f32[1,128]{1,0:T(1,128)}', space=vmem, size = 0x200, scoped, tag = 'scratch operand']
  %s0 = inlined_call_operand.hbm [shape: f32[16,32], index: 0, kind: input, shape index: {}]
  %s1 = inlined_call_operand.hbm [shape: f32[16,32], index: 1, kind: input, shape index: {}]
  %s2 = inlined_call_operand.hbm [shape: f32[1,128], index: 2, kind: output, shape index: {}]
  %s3 = sld [smem:[#allocation0]]
  $region38: #{tpu_custom_call.1} parent=0
    _
  %s5 = ssub.s32 1, %s3
  %s6 = scalar_select 0, %s5, %s3
  $region1: #{tpu_custom_call.1} parent=0
    #allocation3 [shape = 'u8[8192]{0}', space=vmem, size = 0x2000, scoped, tag = 'input window, operand 0, single buffered']
    #allocation4 [shape = 's32[1]{0}', space=sflag, size = 0x4, scoped, tag = 'scoped memory for tpu_custom_call.1']
    #allocation5 [shape = 's32[1]{0}', space=sflag, size = 0x4, scoped, tag = 'scoped memory for tpu_custom_call.1']
    #allocation6 [shape = 'u8[8192]{0}', space=vmem, size = 0x2000, scoped, tag = 'input window, operand 1, single buffered']
    #allocation7 [shape = 's32[1]{0}', space=sflag, size = 0x4, scoped, tag = 'scoped memory for tpu_custom_call.1']
    #allocation8 [shape = 'u8[512]{0}', space=vmem, size = 0x400, scoped, tag = 'output window, operand 0, single buffered']
    %7 = vsyncpa [#allocation4], 0
    %8 = vsyncpa [#allocation7], 0
    %9 = vsyncpa [#allocation5], 0
    // Predicated region
    $region2: #{tpu_custom_call.1} parent=1 // pred_check
      _
    $region3: #{tpu_custom_call.1} parent=1 // pred_check_branch
      %11 = sbr.rel (0) target = $region5
    $region4: #{tpu_custom_call.1} parent=1 // pred_region
      %s12 = sadd.s32 0, 0
      %p13 = scmp.lt.s32.totalorder %s12, 0
      %s14 = scalar_select %p13, %s12, 0
      %s15 = smul.u32 2, %s14
      %s17 = ssub.s32 256, 256
      %18 = vsyncadd [#allocation4], %s17
      %s19 = smul.addr %s15, 128
      %s20 = scalar_lea.hbm %s0, %s19
      %s21 = sshll.u32 [#allocation3], 4
      %s22 = int_to_ptr.vmem [resolvable:$true] %s21
      %27 = dma.hbm_to_vmem [thread:$0]  %s20, 256, %s22, [#allocation4], 128, 128, 8
    $region5: #{tpu_custom_call.1} parent=1 // pred_fallthru
      _
    // Predicated region
    $region6: #{tpu_custom_call.1} parent=1 // pred_check
      _
    $region7: #{tpu_custom_call.1} parent=1 // pred_check_branch
      %29 = sbr.rel (0) target = $region9
    $region8: #{tpu_custom_call.1} parent=1 // pred_region
      %s30 = sadd.s32 0, 0
      %p31 = scmp.lt.s32.totalorder %s30, 0
      %s32 = scalar_select %p31, %s30, 0
      %s33 = smul.u32 2, %s32
      %s35 = ssub.s32 256, 256
      %36 = vsyncadd [#allocation7], %s35
      %s37 = smul.addr %s33, 128
      %s38 = scalar_lea.hbm %s1, %s37
      %s39 = sshll.u32 [#allocation6], 4
      %s40 = int_to_ptr.vmem [resolvable:$true] %s39
      %45 = dma.hbm_to_vmem [thread:$0]  %s38, 256, %s40, [#allocation7], 128, 128, 8
    $region9: #{tpu_custom_call.1} parent=1 // pred_fallthru
      _
    // Predicated region
    $region10: #{tpu_custom_call.1} parent=1 // pred_check
      _
    $region11: #{tpu_custom_call.1} parent=1 // pred_check_branch
      %47 = sbr.rel (0) target = $region13
    $region12: #{tpu_custom_call.1} parent=1 // pred_region
      %48 = dma.done [#allocation4], 256
    $region13: #{tpu_custom_call.1} parent=1 // pred_fallthru
      _
    // Predicated region
    $region14: #{tpu_custom_call.1} parent=1 // pred_check
      _
    $region15: #{tpu_custom_call.1} parent=1 // pred_check_branch
      %50 = sbr.rel (0) target = $region17
    $region16: #{tpu_custom_call.1} parent=1 // pred_region
      %51 = dma.done [#allocation7], 256
    $region17: #{tpu_custom_call.1} parent=1 // pred_fallthru
      _
    %s52 = sadd.s32 0, 0
    %p53 = scmp.lt.s32.totalorder %s52, 0
    %s54 = scalar_select %p53, %s52, 0
    %s55 = smul.u32 2, %s54
    %s56 = sadd.s32 0, 0
    %p57 = scmp.lt.s32.totalorder %s56, 0
    %s58 = scalar_select %p57, %s56, 0
    %s59 = smul.u32 2, %s58
    %p60 = scmp.eq.s32.totalorder 0, 0
    // Predicated region
    $region18: #{tpu_custom_call.1} parent=1 // pred_check
      %p61 = pneg %p60
    $region19: #{tpu_custom_call.1} parent=1 // pred_check_branch
      %63 = sbr.rel (%p61) target = $region21
    $region20: #{tpu_custom_call.1} parent=1 // pred_region
      %64 = vst [vmem:[#allocation2] sm:$0x1] 0.0
    $region21: #{tpu_custom_call.1} parent=1 // pred_fallthru
      _
    %s65 = sadd.s32 0, 0
    %s66 = smul.u32 %s65, 16
    %p67 = scmp.lt.s32.totalorder %s66, 16
    // Predicated region
    $region22: #{tpu_custom_call.1} parent=1 // pred_check
      %p68 = pneg %p67
    $region23: #{tpu_custom_call.1} parent=1 // pred_check_branch
      %70 = sbr.rel (%p68) target = $region25
    $region24: #{tpu_custom_call.1} parent=1 // pred_region
      %v71 = vld [vmem:[#allocation3] sm:$0xff]
      %v72 = vld [vmem:[#allocation3 + $0x8] sm:$0xff]
      %v73 = vmul.f32 %v71, 0.33333334
      %v74 = vmul.f32 %v72, 0.33333334
      %v75 = vld [vmem:[#allocation6] sm:$0xff]
      %v76 = vld [vmem:[#allocation6 + $0x8] sm:$0xff]
      %v77 = vmul.f32 %v75, 0.33333334
      %v78 = vmul.f32 %v76, 0.33333334
      %vm79 = vcmask 261120
      %v80 = vsel %vm79, %v73, -inf
      %81 = vmax.xlane.f32.xlu0 %v80
      %v82 = vpop.xlane.xlu0 %81
      %v83 = vsel %vm79, %v74, -inf
      %84 = vmax.xlane.f32.xlu0 %v83
      %v85 = vpop.xlane.xlu0 %84
      %v86 = vsub.f32 %v73, %v82
      %v87 = vsub.f32 %v74, %v85
      %v88 = vmul.f32 %v86, 1.442695
      %v89 = vpow.pop %v88
      %v90 = vmul.f32 %v87, 1.442695
      %v91 = vpow.pop %v90
      %v92 = vsel %vm79, %v89, 0.0
      %93 = vadd.xlane.f32.xlu0 %v92
      %v94 = vpop.xlane.xlu0 %93
      %v95 = vsel %vm79, %v91, 0.0
      %96 = vadd.xlane.f32.xlu0 %v95
      %v97 = vpop.xlane.xlu0 %96
      %v98 = vlog2.pop %v94
      %v99 = vmul.f32 %v98, 0.6931472
      %v100 = vlog2.pop %v97
      %v101 = vmul.f32 %v100, 0.6931472
      %v102 = vsub.f32 %v86, %v99
      %v103 = vsub.f32 %v87, %v101
      %v104 = vsel %vm79, %v77, -inf
      %105 = vmax.xlane.f32.xlu0 %v104
      %v106 = vpop.xlane.xlu0 %105
      %v107 = vsel %vm79, %v78, -inf
      %108 = vmax.xlane.f32.xlu0 %v107
      %v109 = vpop.xlane.xlu0 %108
      %v110 = vsub.f32 %v77, %v106
      %v111 = vsub.f32 %v78, %v109
      %v112 = vmul.f32 %v110, 1.442695
      %v113 = vpow.pop %v112
      %v114 = vmul.f32 %v111, 1.442695
      %v115 = vpow.pop %v114
      %v116 = vsel %vm79, %v113, 0.0
      %117 = vadd.xlane.f32.xlu0 %v116
      %v118 = vpop.xlane.xlu0 %117
      %v119 = vsel %vm79, %v115, 0.0
      %120 = vadd.xlane.f32.xlu0 %v119
      %v121 = vpop.xlane.xlu0 %120
      %v122 = vrcp.pop %v118
      %v123 = vrcp.pop %v121
      %v124 = vmul.f32 %v113, %v122
      %v125 = vmul.f32 %v115, %v123
      %v126 = vadd.f32 %v124, 1e-07
      %v127 = vadd.f32 %v125, 1e-07
      %v128 = vlog2.pop %v126
      %v129 = vmul.f32 %v128, 0.6931472
      %v130 = vlog2.pop %v127
      %v131 = vmul.f32 %v130, 0.6931472
      %v132 = vsub.f32 %v129, %v102
      %v133 = vsub.f32 %v131, %v103
      %v134 = vmul.f32 %v126, %v132
      %v135 = vmul.f32 %v127, %v133
      %v136 = vsel %vm79, %v134, 0.0
      %137 = vadd.xlane.f32.xlu0 %v136
      %v138 = vpop.xlane.xlu0 %137
      %v139 = vsel %vm79, %v135, 0.0
      %140 = vadd.xlane.f32.xlu0 %v139
      %v141 = vpop.xlane.xlu0 %140
      %v142 = vlaneseq
      %v143 = vshrl.u32 %v142, 7
      %v144 = vadd.s32 %v143, 8
      %v145 = vstv %s66
      %v146 = vadd.s32 %v145, %v143
      %v147 = vadd.s32 %v145, %v144
      %vm148 = vcmp.lt.s32.totalorder %v146, 16
      %vm149 = vcmp.lt.s32.totalorder %v147, 16
      %v150 = vsel %vm148, %v138, 0.0
      %v151 = vsel %vm149, %v141, 0.0
      %vm152 = vcmask 7168
      %v153 = vsel %vm152, %v150, 0.0
      %v154 = vsel %vm152, %v151, 0.0
      %v155 = vadd.f32 %v153, %v154
      %156 = vadd.xlane.f32.xlu0 %v155
      %v157 = vpop.xlane.xlu0 %156
      %v158 = vrot.slane %v157, 4
      %v159 = vadd.f32 %v157, %v158
      %v160 = vrot.slane %v159, 2
      %v161 = vadd.f32 %v159, %v160
      %v162 = vrot.slane %v161, 1
      %v163 = vadd.f32 %v161, %v162
      %s164 = vtos %v163
      %v165 = vld [vmem:[#allocation2] sm:$0x1]
      %v166 = vstv %s164
      %v167 = vadd.f32 %v165, %v166
      %168 = vst [vmem:[#allocation2] sm:$0x1] %v167
    $region25: #{tpu_custom_call.1} parent=1 // pred_fallthru
      _
    // Predicated region
    $region26: #{tpu_custom_call.1} parent=1 // pred_check
      %p169 = pneg %p60
    $region27: #{tpu_custom_call.1} parent=1 // pred_check_branch
      %171 = sbr.rel (%p169) target = $region29
    $region28: #{tpu_custom_call.1} parent=1 // pred_region
      %v172 = vlaneseq
      %v173 = vand.u32 %v172, 127
      %vm174 = vcmp.eq.s32.totalorder %v173, 0
      %v175 = vld [vmem:[#allocation2] sm:$0x1]
      %v176 = vsel %vm174, %v175, 0.0
      %177 = vst [vmem:[#allocation8] sm:$0x1] %v176
    $region29: #{tpu_custom_call.1} parent=1 // pred_fallthru
      _
    // Predicated region
    $region30: #{tpu_custom_call.1} parent=1 // pred_check
      _
    $region31: #{tpu_custom_call.1} parent=1 // pred_check_branch
      %179 = sbr.rel (0) target = $region33
    $region32: #{tpu_custom_call.1} parent=1 // pred_region
      %s181 = ssub.s32 16, 16
      %182 = vsyncadd [#allocation5], %s181
      %s184 = sshll.u32 [#allocation8], 4
      %s185 = int_to_ptr.vmem [resolvable:$true] %s184
      %187 = dma.vmem_to_hbm [thread:$0]  %s185, 16, %s2, [#allocation5]
    $region33: #{tpu_custom_call.1} parent=1 // pred_fallthru
      _
    // Predicated region
    $region34: #{tpu_custom_call.1} parent=1 // pred_check
      _
    $region35: #{tpu_custom_call.1} parent=1 // pred_check_branch
      %189 = sbr.rel (0) target = $region37
    $region36: #{tpu_custom_call.1} parent=1 // pred_region
      %190 = dma.done [#allocation5], 16
    $region37: #{tpu_custom_call.1} parent=1 // pred_fallthru
      _
    %191 = vsyncpa [#allocation4], 1
    %192 = vsyncpa [#allocation7], 1
    %193 = vsyncpa [#allocation5], 1

</llo_original>
